<compile_context>
chip_gen: v7x
topology: tpu7x:2x2x1
jax: 0.10.0
libtpu: 0.0.40
codegen_flags: <defaults>
</compile_context>

<pallas_src>
import jax
import jax.numpy as jnp
from jax.experimental import pallas as pl
from jax.experimental.pallas import tpu as pltpu

TEMP = 0.07
EPS = 1e-12  # torch.nn.functional.normalize default eps
_INV_TEMP = 1.0 / TEMP
_EPS_SQ = EPS * EPS  # 1e-24, representable in f32


def _nce(q, k, neg):
    """InfoNCE with label 0. q, k: [N, C]; neg: [N, K, C]. Returns rank-0 loss."""
    n = q.shape[0]
    # rsqrt-based normalization (EUP op + VPU multiply, no divides).
    qn = q * jax.lax.rsqrt(
        jnp.maximum(jnp.sum(q * q, axis=1, keepdims=True), _EPS_SQ))
    kn = k * jax.lax.rsqrt(
        jnp.maximum(jnp.sum(k * k, axis=1, keepdims=True), _EPS_SQ))

    # l_pos = einsum('nc,nc->n')
    l_pos = jnp.sum(qn * kn, axis=1, keepdims=True)                    # [N, 1]

    # l_neg: batched dot against *unnormalized* negatives on the MXU, then
    # rescale by the per-(n,k) inverse norms (algebraically identical to
    # normalizing neg over C first).
    l_neg_raw = jnp.einsum(
        "nqc,nkc->nqk", qn[:, None, :], neg,
        preferred_element_type=jnp.float32)[:, 0, :]                   # [N, K]
    inv_neg = jax.lax.rsqrt(
        jnp.maximum(jnp.sum(neg * neg, axis=2), _EPS_SQ))              # [N, K]
    l_neg = l_neg_raw * inv_neg

    lp = l_pos * _INV_TEMP                                             # [N, 1]
    ln = l_neg * _INV_TEMP                                             # [N, K]

    # cross-entropy with target class 0 == logsumexp(logits) - logits[:, 0]
    m = jnp.maximum(lp, jnp.max(ln, axis=1, keepdims=True))            # [N, 1]
    lse = m + jnp.log(
        jnp.exp(lp - m) + jnp.sum(jnp.exp(ln - m), axis=1, keepdims=True))
    return jnp.sum(lse - lp) / n                                       # scalar


def snico_kernel(x_ref, out_ref):
    # x_ref: [4, N, T, C] (HA, EA, HB, EB stacked) in VMEM; out_ref: (1,1) SMEM.
    # Cast to f32 at load: correct default for v5e (no bf16 VPU/EUP); on
    # v6e/v7x bf16 inputs would halve DMA bytes if produced upstream in bf16.
    ha = x_ref[0].astype(jnp.float32)   # [N, T, C]
    ea = x_ref[1].astype(jnp.float32)
    hb = x_ref[2].astype(jnp.float32)
    eb = x_ref[3].astype(jnp.float32)

    q_a = jnp.mean(ha, axis=1)          # [N, C]
    k_a = jnp.mean(ea, axis=1)
    q_b = jnp.mean(hb, axis=1)
    k_b = jnp.mean(eb, axis=1)

    ha_refinement = _nce(q_a, k_a, eb)  # scalar
    hb_refinement = _nce(q_b, k_b, ea)  # scalar
    out_ref[0, 0] = ha_refinement + hb_refinement


def _cost_estimate(n, t, c, k):
    mean_flops = 4 * n * t * c
    per_nce = (
        2 * n * k * c      # l_neg batched matmul
        + 2 * n * k * c    # neg squared norms
        + 6 * n * c        # q/k normalize + l_pos
        + 6 * n * k        # l_neg scaling + temperature + softmax elementwise
        + 8 * n
    )
    flops = mean_flops + 2 * per_nce
    transcendentals = 2 * (
        2 * n + n * k      # rsqrt
        + n * (k + 1)      # exp
        + n                # log
    )
    bytes_accessed = 4 * n * t * c * 4 + 4
    return pl.CostEstimate(
        flops=flops, transcendentals=transcendentals,
        bytes_accessed=bytes_accessed)


def snico_loss(ha, ea, hb, eb):
    n, t, c = ha.shape
    k = ea.shape[1]
    # One stacked input -> one DMA descriptor instead of four.
    x = jnp.stack([ha, ea, hb, eb], axis=0)  # [4, N, T, C]
    out = pl.pallas_call(
        snico_kernel,
        out_shape=jax.ShapeDtypeStruct((1, 1), jnp.float32),
        in_specs=[pl.BlockSpec(memory_space=pltpu.MemorySpace.VMEM)],
        out_specs=pl.BlockSpec(memory_space=pltpu.MemorySpace.SMEM),
        compiler_params=pltpu.CompilerParams(
            vmem_limit_bytes=8 * 1024 * 1024),
        cost_estimate=_cost_estimate(n, t, c, k),
    )(x)
    return out[0, 0]


def snico_loss_ref(ha, ea, hb, eb):
    """Pure-JAX reference mirroring the PyTorch forward."""
    def nce(q, k, neg, temp=TEMP):
        qn = q / jnp.maximum(jnp.linalg.norm(q, axis=1, keepdims=True), EPS)
        kn = k / jnp.maximum(jnp.linalg.norm(k, axis=1, keepdims=True), EPS)
        negn = neg / jnp.maximum(
            jnp.linalg.norm(neg, axis=2, keepdims=True), EPS)
        l_pos = jnp.sum(qn * kn, axis=1, keepdims=True)
        l_neg = jnp.einsum("nc,nkc->nk", qn, negn)
        logits = jnp.concatenate([l_pos, l_neg], axis=1) / temp
        lse = jax.scipy.special.logsumexp(logits, axis=1)
        return jnp.mean(lse - logits[:, 0])

    return nce(jnp.mean(ha, 1), jnp.mean(ea, 1), eb) + nce(
        jnp.mean(hb, 1), jnp.mean(eb, 1), ea)


if __name__ == "__main__":
    # Small shapes consistent with the module: N=2 videos, 8 snippets, C=32 feats.
    N, T, C = 2, 8, 32
    key = jax.random.PRNGKey(0)
    k_ha, k_ea, k_hb, k_eb = jax.random.split(key, 4)
    HA = jax.random.normal(k_ha, (N, T, C), dtype=jnp.float32)
    EA = jax.random.normal(k_ea, (N, T, C), dtype=jnp.float32)
    HB = jax.random.normal(k_hb, (N, T, C), dtype=jnp.float32)
    EB = jax.random.normal(k_eb, (N, T, C), dtype=jnp.float32)

    loss = snico_loss(HA, EA, HB, EB)
    jax.block_until_ready(loss)

    ref = snico_loss_ref(HA, EA, HB, EB)
    # Slightly looser tolerance than exact-VPU math: l_neg now runs on the MXU,
    # whose f32 pass rounding can differ from the pure elementwise reference.
    assert jnp.allclose(loss, ref, rtol=1e-2, atol=1e-3), (loss, ref)

    print("KERNEL_OK")
</pallas_src>

<mosaic_0001>
module attributes {stable_mosaic.version = 11 : i64} {
  func.func @snico_kernel(%arg0: memref<4x2x8x32xf32, #tpu.memory_space<vmem>>, %arg1: memref<1x1xf32, #tpu.memory_space<smem>>) attributes {dimension_semantics = [], scalar_prefetch = 0 : i64, scratch_operands = 0 : i64, tpu.core_type = #tpu.core_type<tc>} {
    %c0 = arith.constant 0 : index
    %c0_0 = arith.constant 0 : index
    %c0_1 = arith.constant 0 : index
    %c0_2 = arith.constant 0 : index
    %0 = vector.load %arg0[%c0, %c0_0, %c0_1, %c0_2] : memref<4x2x8x32xf32, #tpu.memory_space<vmem>>, vector<1x2x8x32xf32>
    %1 = vector.shape_cast %0 : vector<1x2x8x32xf32> to vector<2x8x32xf32>
    %c1 = arith.constant 1 : index
    %c0_3 = arith.constant 0 : index
    %c0_4 = arith.constant 0 : index
    %c0_5 = arith.constant 0 : index
    %2 = vector.load %arg0[%c1, %c0_3, %c0_4, %c0_5] : memref<4x2x8x32xf32, #tpu.memory_space<vmem>>, vector<1x2x8x32xf32>
    %3 = vector.shape_cast %2 : vector<1x2x8x32xf32> to vector<2x8x32xf32>
    %c2 = arith.constant 2 : index
    %c0_6 = arith.constant 0 : index
    %c0_7 = arith.constant 0 : index
    %c0_8 = arith.constant 0 : index
    %4 = vector.load %arg0[%c2, %c0_6, %c0_7, %c0_8] : memref<4x2x8x32xf32, #tpu.memory_space<vmem>>, vector<1x2x8x32xf32>
    %5 = vector.shape_cast %4 : vector<1x2x8x32xf32> to vector<2x8x32xf32>
    %c3 = arith.constant 3 : index
    %c0_9 = arith.constant 0 : index
    %c0_10 = arith.constant 0 : index
    %c0_11 = arith.constant 0 : index
    %6 = vector.load %arg0[%c3, %c0_9, %c0_10, %c0_11] : memref<4x2x8x32xf32, #tpu.memory_space<vmem>>, vector<1x2x8x32xf32>
    %7 = vector.shape_cast %6 : vector<1x2x8x32xf32> to vector<2x8x32xf32>
    %cst = arith.constant dense<0.000000e+00> : vector<2x32xf32>
    %8 = vector.multi_reduction <add>, %1, %cst [1] : vector<2x8x32xf32> to vector<2x32xf32>
    %cst_12 = arith.constant 8.000000e+00 : f32
    %9 = vector.broadcast %cst_12 : f32 to vector<2x32xf32>
    %10 = arith.divf %8, %9 : vector<2x32xf32>
    %cst_13 = arith.constant dense<0.000000e+00> : vector<2x32xf32>
    %11 = vector.multi_reduction <add>, %3, %cst_13 [1] : vector<2x8x32xf32> to vector<2x32xf32>
    %cst_14 = arith.constant 8.000000e+00 : f32
    %12 = vector.broadcast %cst_14 : f32 to vector<2x32xf32>
    %13 = arith.divf %11, %12 : vector<2x32xf32>
    %cst_15 = arith.constant dense<0.000000e+00> : vector<2x32xf32>
    %14 = vector.multi_reduction <add>, %5, %cst_15 [1] : vector<2x8x32xf32> to vector<2x32xf32>
    %cst_16 = arith.constant 8.000000e+00 : f32
    %15 = vector.broadcast %cst_16 : f32 to vector<2x32xf32>
    %16 = arith.divf %14, %15 : vector<2x32xf32>
    %cst_17 = arith.constant dense<0.000000e+00> : vector<2x32xf32>
    %17 = vector.multi_reduction <add>, %7, %cst_17 [1] : vector<2x8x32xf32> to vector<2x32xf32>
    %cst_18 = arith.constant 8.000000e+00 : f32
    %18 = vector.broadcast %cst_18 : f32 to vector<2x32xf32>
    %19 = arith.divf %17, %18 : vector<2x32xf32>
    %20 = arith.mulf %10, %10 : vector<2x32xf32>
    %cst_19 = arith.constant dense<0.000000e+00> : vector<2xf32>
    %21 = vector.multi_reduction <add>, %20, %cst_19 [1] : vector<2x32xf32> to vector<2xf32>
    %22 = vector.shape_cast %21 : vector<2xf32> to vector<2x1xf32>
    %cst_20 = arith.constant 1.000000e-24 : f32
    %23 = vector.broadcast %cst_20 : f32 to vector<2x1xf32>
    %24 = arith.maximumf %22, %23 : vector<2x1xf32>
    %25 = math.rsqrt %24 : vector<2x1xf32>
    %26 = vector.broadcast %25 : vector<2x1xf32> to vector<2x32xf32>
    %27 = arith.mulf %10, %26 : vector<2x32xf32>
    %28 = arith.mulf %13, %13 : vector<2x32xf32>
    %cst_21 = arith.constant dense<0.000000e+00> : vector<2xf32>
    %29 = vector.multi_reduction <add>, %28, %cst_21 [1] : vector<2x32xf32> to vector<2xf32>
    %30 = vector.shape_cast %29 : vector<2xf32> to vector<2x1xf32>
    %cst_22 = arith.constant 1.000000e-24 : f32
    %31 = vector.broadcast %cst_22 : f32 to vector<2x1xf32>
    %32 = arith.maximumf %30, %31 : vector<2x1xf32>
    %33 = math.rsqrt %32 : vector<2x1xf32>
    %34 = vector.broadcast %33 : vector<2x1xf32> to vector<2x32xf32>
    %35 = arith.mulf %13, %34 : vector<2x32xf32>
    %36 = arith.mulf %27, %35 : vector<2x32xf32>
    %cst_23 = arith.constant dense<0.000000e+00> : vector<2xf32>
    %37 = vector.multi_reduction <add>, %36, %cst_23 [1] : vector<2x32xf32> to vector<2xf32>
    %38 = vector.shape_cast %37 : vector<2xf32> to vector<2x1xf32>
    %39 = vector.shape_cast %27 : vector<2x32xf32> to vector<2x1x32xf32>
    "tpu.trace_start"() <{level = 10 : i32, message = "nqc,nkc->nqk"}> : () -> ()
    %cst_24 = arith.constant dense<0.000000e+00> : vector<2x1x8xf32>
    %40 = tpu.matmul %39, %7, %cst_24 {dimension_numbers = #tpu.dot_dimension_numbers<[2], [2], [1], [1], [0, 0, 0, 1, 1, 1], [0], [0]>} : vector<2x1x32xf32>, vector<2x8x32xf32>, vector<2x1x8xf32> -> vector<2x1x8xf32>
    "tpu.trace_stop"() : () -> ()
    %41 = vector.shape_cast %40 : vector<2x1x8xf32> to vector<2x8xf32>
    %42 = arith.mulf %7, %7 : vector<2x8x32xf32>
    %cst_25 = arith.constant dense<0.000000e+00> : vector<2x8xf32>
    %43 = vector.multi_reduction <add>, %42, %cst_25 [2] : vector<2x8x32xf32> to vector<2x8xf32>
    %cst_26 = arith.constant 1.000000e-24 : f32
    %44 = vector.broadcast %cst_26 : f32 to vector<2x8xf32>
    %45 = arith.maximumf %43, %44 : vector<2x8xf32>
    %46 = math.rsqrt %45 : vector<2x8xf32>
    %47 = arith.mulf %41, %46 : vector<2x8xf32>
    %cst_27 = arith.constant 14.2857141 : f32
    %48 = vector.broadcast %cst_27 : f32 to vector<2x1xf32>
    %49 = arith.mulf %38, %48 : vector<2x1xf32>
    %cst_28 = arith.constant 14.2857141 : f32
    %50 = vector.broadcast %cst_28 : f32 to vector<2x8xf32>
    %51 = arith.mulf %47, %50 : vector<2x8xf32>
    %cst_29 = arith.constant dense<0xFF800000> : vector<2xf32>
    %52 = vector.multi_reduction <maximumf>, %51, %cst_29 [1] : vector<2x8xf32> to vector<2xf32>
    %53 = vector.shape_cast %52 : vector<2xf32> to vector<2x1xf32>
    %54 = arith.maximumf %49, %53 : vector<2x1xf32>
    %55 = arith.subf %49, %54 : vector<2x1xf32>
    %56 = math.exp %55 : vector<2x1xf32>
    %57 = vector.broadcast %54 : vector<2x1xf32> to vector<2x8xf32>
    %58 = arith.subf %51, %57 : vector<2x8xf32>
    %59 = math.exp %58 : vector<2x8xf32>
    %cst_30 = arith.constant dense<0.000000e+00> : vector<2xf32>
    %60 = vector.multi_reduction <add>, %59, %cst_30 [1] : vector<2x8xf32> to vector<2xf32>
    %61 = vector.shape_cast %60 : vector<2xf32> to vector<2x1xf32>
    %62 = arith.addf %56, %61 : vector<2x1xf32>
    %63 = math.log %62 : vector<2x1xf32>
    %64 = arith.addf %54, %63 : vector<2x1xf32>
    %65 = arith.subf %64, %49 : vector<2x1xf32>
    %66 = vector.shape_cast %65 : vector<2x1xf32> to vector<1x2x1xf32>
    %cst_31 = arith.constant dense<0.000000e+00> : vector<1xf32>
    %67 = vector.multi_reduction <add>, %66, %cst_31 [1, 2] : vector<1x2x1xf32> to vector<1xf32>
    %68 = vector.shape_cast %67 : vector<1xf32> to vector<1x1x1xf32>
    %69 = vector.extract %68[0, 0, 0] : f32 from vector<1x1x1xf32>
    %cst_32 = arith.constant 2.000000e+00 : f32
    %70 = arith.divf %69, %cst_32 : f32
    %71 = arith.mulf %16, %16 : vector<2x32xf32>
    %cst_33 = arith.constant dense<0.000000e+00> : vector<2xf32>
    %72 = vector.multi_reduction <add>, %71, %cst_33 [1] : vector<2x32xf32> to vector<2xf32>
    %73 = vector.shape_cast %72 : vector<2xf32> to vector<2x1xf32>
    %cst_34 = arith.constant 1.000000e-24 : f32
    %74 = vector.broadcast %cst_34 : f32 to vector<2x1xf32>
    %75 = arith.maximumf %73, %74 : vector<2x1xf32>
    %76 = math.rsqrt %75 : vector<2x1xf32>
    %77 = vector.broadcast %76 : vector<2x1xf32> to vector<2x32xf32>
    %78 = arith.mulf %16, %77 : vector<2x32xf32>
    %79 = arith.mulf %19, %19 : vector<2x32xf32>
    %cst_35 = arith.constant dense<0.000000e+00> : vector<2xf32>
    %80 = vector.multi_reduction <add>, %79, %cst_35 [1] : vector<2x32xf32> to vector<2xf32>
    %81 = vector.shape_cast %80 : vector<2xf32> to vector<2x1xf32>
    %cst_36 = arith.constant 1.000000e-24 : f32
    %82 = vector.broadcast %cst_36 : f32 to vector<2x1xf32>
    %83 = arith.maximumf %81, %82 : vector<2x1xf32>
    %84 = math.rsqrt %83 : vector<2x1xf32>
    %85 = vector.broadcast %84 : vector<2x1xf32> to vector<2x32xf32>
    %86 = arith.mulf %19, %85 : vector<2x32xf32>
    %87 = arith.mulf %78, %86 : vector<2x32xf32>
    %cst_37 = arith.constant dense<0.000000e+00> : vector<2xf32>
    %88 = vector.multi_reduction <add>, %87, %cst_37 [1] : vector<2x32xf32> to vector<2xf32>
    %89 = vector.shape_cast %88 : vector<2xf32> to vector<2x1xf32>
    %90 = vector.shape_cast %78 : vector<2x32xf32> to vector<2x1x32xf32>
    "tpu.trace_start"() <{level = 10 : i32, message = "nqc,nkc->nqk"}> : () -> ()
    %cst_38 = arith.constant dense<0.000000e+00> : vector<2x1x8xf32>
    %91 = tpu.matmul %90, %3, %cst_38 {dimension_numbers = #tpu.dot_dimension_numbers<[2], [2], [1], [1], [0, 0, 0, 1, 1, 1], [0], [0]>} : vector<2x1x32xf32>, vector<2x8x32xf32>, vector<2x1x8xf32> -> vector<2x1x8xf32>
    "tpu.trace_stop"() : () -> ()
    %92 = vector.shape_cast %91 : vector<2x1x8xf32> to vector<2x8xf32>
    %93 = arith.mulf %3, %3 : vector<2x8x32xf32>
    %cst_39 = arith.constant dense<0.000000e+00> : vector<2x8xf32>
    %94 = vector.multi_reduction <add>, %93, %cst_39 [2] : vector<2x8x32xf32> to vector<2x8xf32>
    %cst_40 = arith.constant 1.000000e-24 : f32
    %95 = vector.broadcast %cst_40 : f32 to vector<2x8xf32>
    %96 = arith.maximumf %94, %95 : vector<2x8xf32>
    %97 = math.rsqrt %96 : vector<2x8xf32>
    %98 = arith.mulf %92, %97 : vector<2x8xf32>
    %cst_41 = arith.constant 14.2857141 : f32
    %99 = vector.broadcast %cst_41 : f32 to vector<2x1xf32>
    %100 = arith.mulf %89, %99 : vector<2x1xf32>
    %cst_42 = arith.constant 14.2857141 : f32
    %101 = vector.broadcast %cst_42 : f32 to vector<2x8xf32>
    %102 = arith.mulf %98, %101 : vector<2x8xf32>
    %cst_43 = arith.constant dense<0xFF800000> : vector<2xf32>
    %103 = vector.multi_reduction <maximumf>, %102, %cst_43 [1] : vector<2x8xf32> to vector<2xf32>
    %104 = vector.shape_cast %103 : vector<2xf32> to vector<2x1xf32>
    %105 = arith.maximumf %100, %104 : vector<2x1xf32>
    %106 = arith.subf %100, %105 : vector<2x1xf32>
    %107 = math.exp %106 : vector<2x1xf32>
    %108 = vector.broadcast %105 : vector<2x1xf32> to vector<2x8xf32>
    %109 = arith.subf %102, %108 : vector<2x8xf32>
    %110 = math.exp %109 : vector<2x8xf32>
    %cst_44 = arith.constant dense<0.000000e+00> : vector<2xf32>
    %111 = vector.multi_reduction <add>, %110, %cst_44 [1] : vector<2x8xf32> to vector<2xf32>
    %112 = vector.shape_cast %111 : vector<2xf32> to vector<2x1xf32>
    %113 = arith.addf %107, %112 : vector<2x1xf32>
    %114 = math.log %113 : vector<2x1xf32>
    %115 = arith.addf %105, %114 : vector<2x1xf32>
    %116 = arith.subf %115, %100 : vector<2x1xf32>
    %117 = vector.shape_cast %116 : vector<2x1xf32> to vector<1x2x1xf32>
    %cst_45 = arith.constant dense<0.000000e+00> : vector<1xf32>
    %118 = vector.multi_reduction <add>, %117, %cst_45 [1, 2] : vector<1x2x1xf32> to vector<1xf32>
    %119 = vector.shape_cast %118 : vector<1xf32> to vector<1x1x1xf32>
    %120 = vector.extract %119[0, 0, 0] : f32 from vector<1x1x1xf32>
    %cst_46 = arith.constant 2.000000e+00 : f32
    %121 = arith.divf %120, %cst_46 : f32
    %122 = arith.addf %70, %121 : f32
    %c0_47 = arith.constant 0 : index
    %c0_48 = arith.constant 0 : index
    %123 = memref.load %arg1[%c0_47, %c0_48] : memref<1x1xf32, #tpu.memory_space<smem>>
    memref.store %122, %arg1[%c0_47, %c0_48] : memref<1x1xf32, #tpu.memory_space<smem>>
    return
  }
}

</mosaic_0001>

<llo_original>
// kernel: tpu_custom_call.1
$region0: #{tpu_custom_call.1}
  #allocation0 [shape = 'u32[]', space=smem, size = 0x4, offset = 0x4, fixed_abs, tag = 'smem constant byte address 0x4 - core index']
  #allocation1 [shape = 'u32[144,128]{1,0:T(1,128)}', space=vmem, size = 0x12000, scoped, tag = 'internal scratch']
  %s0 = inlined_call_operand.hbm [shape: f32[4,2,8,32], index: 0, kind: input, shape index: {}]
  %s1 = inlined_call_operand.hbm [shape: f32[1,1], index: 1, kind: output, shape index: {}]
  %s2 = sld [smem:[#allocation0]]
  $region18: #{tpu_custom_call.1} parent=0
    _
  %s4 = ssub.s32 1, %s2
  %s5 = scalar_select 0, %s4, %s2
  $region1: #{tpu_custom_call.1} parent=0
    #allocation2 [shape = 'u8[32768]{0}', space=vmem, size = 0x8000, scoped, tag = 'input window, operand 0, single buffered']
    #allocation3 [shape = 's32[1]{0}', space=sflag, size = 0x4, scoped, tag = 'scoped memory for tpu_custom_call.1']
    #allocation4 [shape = 's32[1]{0}', space=sflag, size = 0x4, scoped, tag = 'scoped memory for tpu_custom_call.1']
    #allocation5 [shape = 'u8[512]{0}', space=smem, size = 0x200, scoped, tag = 'output window, operand 0, single buffered']
    %6 = vsyncpa [#allocation3], 0
    %7 = vsyncpa [#allocation4], 0
    // Predicated region
    $region2: #{tpu_custom_call.1} parent=1 // pred_check
      _
    $region3: #{tpu_custom_call.1} parent=1 // pred_check_branch
      %9 = sbr.rel (0) target = $region5
    $region4: #{tpu_custom_call.1} parent=1 // pred_region
      %s11 = ssub.s32 1024, 1024
      %12 = vsyncadd [#allocation3], %s11
      %s13 = sshll.u32 [#allocation2], 4
      %s14 = int_to_ptr.vmem [resolvable:$true] %s13
      %19 = dma.hbm_to_vmem [thread:$0]  %s0, 1024, %s14, [#allocation3], 128, 128, 8
    $region5: #{tpu_custom_call.1} parent=1 // pred_fallthru
      _
    // Predicated region
    $region6: #{tpu_custom_call.1} parent=1 // pred_check
      _
    $region7: #{tpu_custom_call.1} parent=1 // pred_check_branch
      %21 = sbr.rel (0) target = $region9
    $region8: #{tpu_custom_call.1} parent=1 // pred_region
      %22 = dma.done [#allocation3], 1024
    $region9: #{tpu_custom_call.1} parent=1 // pred_fallthru
      _
    %v23 = vld [vmem:[#allocation2] sm:$0xff]
    %v24 = vld [vmem:[#allocation2 + $0x8] sm:$0xff]
    %s25 = scalar_lea.vmem [#allocation2], 16
    %v26 = vld [vmem:[%s25] sm:$0xff]
    %v27 = vld [vmem:[%s25 + $0x8] sm:$0xff]
    %s28 = scalar_lea.vmem [#allocation2], 32
    %v29 = vld [vmem:[%s28] sm:$0xff]
    %v30 = vld [vmem:[%s28 + $0x8] sm:$0xff]
    %s31 = scalar_lea.vmem [#allocation2], 48
    %v32 = vld [vmem:[%s31] sm:$0xff]
    %v33 = vld [vmem:[%s31 + $0x8] sm:$0xff]
    %vm34 = vcmask 261120
    %v35 = vsel %vm34, %v23, 0.0
    %v36 = vrot.slane %v35, 4
    %v37 = vadd.f32 %v35, %v36
    %v38 = vrot.slane %v37, 2
    %v39 = vadd.f32 %v37, %v38
    %v40 = vrot.slane %v39, 1
    %v41 = vadd.f32 %v39, %v40
    %v42 = vsel %vm34, %v24, 0.0
    %v43 = vrot.slane %v42, 4
    %v44 = vadd.f32 %v42, %v43
    %v45 = vrot.slane %v44, 2
    %v46 = vadd.f32 %v44, %v45
    %v47 = vrot.slane %v46, 1
    %v48 = vadd.f32 %v46, %v47
    %v49 = vrcp.pop 8.0
    %v50 = vmul.f32 %v41, %v49
    %v51 = vmul.f32 %v48, %v49
    %v52 = vsel %vm34, %v26, 0.0
    %v53 = vrot.slane %v52, 4
    %v54 = vadd.f32 %v52, %v53
    %v55 = vrot.slane %v54, 2
    %v56 = vadd.f32 %v54, %v55
    %v57 = vrot.slane %v56, 1
    %v58 = vadd.f32 %v56, %v57
    %v59 = vsel %vm34, %v27, 0.0
    %v60 = vrot.slane %v59, 4
    %v61 = vadd.f32 %v59, %v60
    %v62 = vrot.slane %v61, 2
    %v63 = vadd.f32 %v61, %v62
    %v64 = vrot.slane %v63, 1
    %v65 = vadd.f32 %v63, %v64
    %v66 = vmul.f32 %v58, %v49
    %v67 = vmul.f32 %v65, %v49
    %v68 = vsel %vm34, %v29, 0.0
    %v69 = vrot.slane %v68, 4
    %v70 = vadd.f32 %v68, %v69
    %v71 = vrot.slane %v70, 2
    %v72 = vadd.f32 %v70, %v71
    %v73 = vrot.slane %v72, 1
    %v74 = vadd.f32 %v72, %v73
    %v75 = vsel %vm34, %v30, 0.0
    %v76 = vrot.slane %v75, 4
    %v77 = vadd.f32 %v75, %v76
    %v78 = vrot.slane %v77, 2
    %v79 = vadd.f32 %v77, %v78
    %v80 = vrot.slane %v79, 1
    %v81 = vadd.f32 %v79, %v80
    %v82 = vmul.f32 %v74, %v49
    %v83 = vmul.f32 %v81, %v49
    %v84 = vsel %vm34, %v32, 0.0
    %v85 = vrot.slane %v84, 4
    %v86 = vadd.f32 %v84, %v85
    %v87 = vrot.slane %v86, 2
    %v88 = vadd.f32 %v86, %v87
    %v89 = vrot.slane %v88, 1
    %v90 = vadd.f32 %v88, %v89
    %v91 = vsel %vm34, %v33, 0.0
    %v92 = vrot.slane %v91, 4
    %v93 = vadd.f32 %v91, %v92
    %v94 = vrot.slane %v93, 2
    %v95 = vadd.f32 %v93, %v94
    %v96 = vrot.slane %v95, 1
    %v97 = vadd.f32 %v95, %v96
    %v98 = vmul.f32 %v90, %v49
    %v99 = vmul.f32 %v97, %v49
    %v100 = vmul.f32 %v50, %v50
    %v101 = vmul.f32 %v51, %v51
    %vm104 = vcmask 1041409
    %v105 = vsel %vm104, %v101, %v100
    %vm107 = vcmask 254976
    %v108 = vsel %vm107, %v105, 0.0
    %109 = vadd.xlane.f32.xlu0 %v108
    %v110 = vpop.xlane.xlu0 %109
    %v111 = vmax.f32 %v110, 1e-24
    %v112 = vrsqrt.pop %v111
    %v114 = vrot.slane %v112, 1
    %v117 = vmul.f32 %v50, %v112
    %v118 = vmul.f32 %v51, %v114
    %v119 = vmul.f32 %v66, %v66
    %v120 = vmul.f32 %v67, %v67
    %v123 = vsel %vm104, %v120, %v119
    %v125 = vsel %vm107, %v123, 0.0
    %126 = vadd.xlane.f32.xlu0 %v125
    %v127 = vpop.xlane.xlu0 %126
    %v128 = vmax.f32 %v127, 1e-24
    %v129 = vrsqrt.pop %v128
    %v131 = vrot.slane %v129, 1
    %v134 = vmul.f32 %v66, %v129
    %v135 = vmul.f32 %v67, %v131
    %v136 = vmul.f32 %v117, %v134
    %v137 = vmul.f32 %v118, %v135
    %v140 = vrot.slane %v137, 7
    %v141 = vsel %vm104, %v140, %v136
    %v143 = vsel %vm107, %v141, 0.0
    %144 = vadd.xlane.f32.xlu0 %v143
    %v145 = vpop.xlane.xlu0 %144
    %v147 = vsel %vm34, %v117, 0
    %v150 = vsel %vm34, %v32, 0
    %152 = vmatprep.subr.mxu0 0.0
    %153 = vmatpush1.xpose.msra.mxu0 %v150
    %154 = vmatprep.subr.mxu0 0.0
    %155 = vmatpush1.xpose.msra.mxu0 0.0
    %156 = vmatprep.subr.mxu0 0.0
    %157 = vmatpush1.xpose.msra.mxu0 0.0
    %158 = vmatprep.subr.mxu0 0.0
    %159 = vmatpush1.xpose.msra.mxu0 0.0
    %160 = vmatprep.subr.mxu0 0.0
    %161 = vmatpush1.xpose.msra.mxu0 0.0
    %162 = vmatprep.subr.mxu0 0.0
    %163 = vmatpush1.xpose.msra.mxu0 0.0
    %164 = vmatprep.subr.mxu0 0.0
    %165 = vmatpush1.xpose.msra.mxu0 0.0
    %166 = vmatprep.subr.mxu0 0.0
    %167 = vmatpush1.xpose.msra.mxu0 0.0
    %168 = vmatprep.subr.mxu0 0.0
    %169 = vmatpush1.xpose.msra.mxu0 0.0
    %170 = vmatprep.subr.mxu0 0.0
    %171 = vmatpush1.xpose.msra.mxu0 0.0
    %172 = vmatprep.subr.mxu0 0.0
    %173 = vmatpush1.xpose.msra.mxu0 0.0
    %174 = vmatprep.subr.mxu0 0.0
    %175 = vmatpush1.xpose.msra.mxu0 0.0
    %176 = vmatprep.subr.mxu0 0.0
    %177 = vmatpush1.xpose.msra.mxu0 0.0
    %178 = vmatprep.subr.mxu0 0.0
    %179 = vmatpush1.xpose.msra.mxu0 0.0
    %180 = vmatprep.subr.mxu0 0.0
    %181 = vmatpush1.xpose.msra.mxu0 0.0
    %182 = vmatprep.subr.mxu0 0.0
    %183 = vmatpush1.xpose.msra.mxu0 0.0
    %184 = vmatprep.subr.mxu0 0.0
    %185 = vmatpush1.xpose.msra.mxu0 0.0
    %186 = vmatprep.subr.mxu0 0.0
    %187 = vmatpush1.xpose.msra.mxu0 0.0
    %188 = vmatprep.subr.mxu0 0.0
    %189 = vmatpush1.xpose.msra.mxu0 0.0
    %190 = vmatprep.subr.mxu0 0.0
    %191 = vmatpush1.xpose.msra.mxu0 0.0
    %192 = vmatprep.subr.mxu0 0.0
    %193 = vmatpush1.xpose.msra.mxu0 0.0
    %194 = vmatprep.subr.mxu0 0.0
    %195 = vmatpush1.xpose.msra.mxu0 0.0
    %196 = vmatprep.subr.mxu0 0.0
    %197 = vmatpush1.xpose.msra.mxu0 0.0
    %198 = vmatprep.subr.mxu0 0.0
    %199 = vmatpush1.xpose.msra.mxu0 0.0
    %200 = vmatprep.subr.mxu0 0.0
    %201 = vmatpush1.xpose.msra.mxu0 0.0
    %202 = vmatprep.subr.mxu0 0.0
    %203 = vmatpush1.xpose.msra.mxu0 0.0
    %204 = vmatprep.subr.mxu0 0.0
    %205 = vmatpush1.xpose.msra.mxu0 0.0
    %206 = vmatprep.subr.mxu0 0.0
    %207 = vmatpush1.xpose.msra.mxu0 0.0
    %208 = vmatprep.subr.mxu0 0.0
    %209 = vmatpush1.xpose.msra.mxu0 0.0
    %210 = vmatprep.subr.mxu0 0.0
    %211 = vmatpush1.xpose.msra.mxu0 0.0
    %212 = vmatprep.subr.mxu0 0.0
    %213 = vmatpush1.xpose.msra.mxu0 0.0
    %214 = vmatprep.subr.mxu0 0.0
    %215 = vmatpush1.xpose.msra.mxu0 0.0
    %216 = vmatprep.mubr.f32.mxu0 0.0
    %217 = vmatmul.mubr.f32.gmra.mrb[0].mxu0 %v147
    %v218 = vpop.f32.mrb[0].mxu0
    %v219 = vadd.f32 0.0, %v218
    %v220 = vpop.f32.mrb[0].mxu0
    %221 = vdwg.mxu0
    %v223 = vsel %vm34, %v118, 0
    %v226 = vsel %vm34, %v33, 0
    %228 = vmatprep.subr.mxu0 0.0
    %229 = vmatpush1.xpose.msra.mxu0 %v226
    %230 = vmatprep.subr.mxu0 0.0
    %231 = vmatpush1.xpose.msra.mxu0 0.0
    %232 = vmatprep.subr.mxu0 0.0
    %233 = vmatpush1.xpose.msra.mxu0 0.0
    %234 = vmatprep.subr.mxu0 0.0
    %235 = vmatpush1.xpose.msra.mxu0 0.0
    %236 = vmatprep.subr.mxu0 0.0
    %237 = vmatpush1.xpose.msra.mxu0 0.0
    %238 = vmatprep.subr.mxu0 0.0
    %239 = vmatpush1.xpose.msra.mxu0 0.0
    %240 = vmatprep.subr.mxu0 0.0
    %241 = vmatpush1.xpose.msra.mxu0 0.0
    %242 = vmatprep.subr.mxu0 0.0
    %243 = vmatpush1.xpose.msra.mxu0 0.0
    %244 = vmatprep.subr.mxu0 0.0
    %245 = vmatpush1.xpose.msra.mxu0 0.0
    %246 = vmatprep.subr.mxu0 0.0
    %247 = vmatpush1.xpose.msra.mxu0 0.0
    %248 = vmatprep.subr.mxu0 0.0
    %249 = vmatpush1.xpose.msra.mxu0 0.0
    %250 = vmatprep.subr.mxu0 0.0
    %251 = vmatpush1.xpose.msra.mxu0 0.0
    %252 = vmatprep.subr.mxu0 0.0
    %253 = vmatpush1.xpose.msra.mxu0 0.0
    %254 = vmatprep.subr.mxu0 0.0
    %255 = vmatpush1.xpose.msra.mxu0 0.0
    %256 = vmatprep.subr.mxu0 0.0
    %257 = vmatpush1.xpose.msra.mxu0 0.0
    %258 = vmatprep.subr.mxu0 0.0
    %259 = vmatpush1.xpose.msra.mxu0 0.0
    %260 = vmatprep.subr.mxu0 0.0
    %261 = vmatpush1.xpose.msra.mxu0 0.0
    %262 = vmatprep.subr.mxu0 0.0
    %263 = vmatpush1.xpose.msra.mxu0 0.0
    %264 = vmatprep.subr.mxu0 0.0
    %265 = vmatpush1.xpose.msra.mxu0 0.0
    %266 = vmatprep.subr.mxu0 0.0
    %267 = vmatpush1.xpose.msra.mxu0 0.0
    %268 = vmatprep.subr.mxu0 0.0
    %269 = vmatpush1.xpose.msra.mxu0 0.0
    %270 = vmatprep.subr.mxu0 0.0
    %271 = vmatpush1.xpose.msra.mxu0 0.0
    %272 = vmatprep.subr.mxu0 0.0
    %273 = vmatpush1.xpose.msra.mxu0 0.0
    %274 = vmatprep.subr.mxu0 0.0
    %275 = vmatpush1.xpose.msra.mxu0 0.0
    %276 = vmatprep.subr.mxu0 0.0
    %277 = vmatpush1.xpose.msra.mxu0 0.0
    %278 = vmatprep.subr.mxu0 0.0
    %279 = vmatpush1.xpose.msra.mxu0 0.0
    %280 = vmatprep.subr.mxu0 0.0
    %281 = vmatpush1.xpose.msra.mxu0 0.0
    %282 = vmatprep.subr.mxu0 0.0
    %283 = vmatpush1.xpose.msra.mxu0 0.0
    %284 = vmatprep.subr.mxu0 0.0
    %285 = vmatpush1.xpose.msra.mxu0 0.0
    %286 = vmatprep.subr.mxu0 0.0
    %287 = vmatpush1.xpose.msra.mxu0 0.0
    %288 = vmatprep.subr.mxu0 0.0
    %289 = vmatpush1.xpose.msra.mxu0 0.0
    %290 = vmatprep.subr.mxu0 0.0
    %291 = vmatpush1.xpose.msra.mxu0 0.0
    %292 = vmatprep.mubr.f32.mxu0 0.0
    %293 = vmatmul.mubr.f32.gmra.mrb[0].mxu0 %v223
    %v294 = vpop.f32.mrb[0].mxu0
    %v295 = vadd.f32 0.0, %v294
    %v296 = vpop.f32.mrb[0].mxu0
    %297 = vdwg.mxu0
    %v298 = vmul.f32 %v32, %v32
    %v299 = vmul.f32 %v33, %v33
    %v300 = vsel %vm34, %v298, 0.0
    %301 = vadd.xlane.f32.xlu0 %v300
    %v302 = vpop.xlane.xlu0 %301
    %v303 = vsel %vm34, %v299, 0.0
    %304 = vadd.xlane.f32.xlu0 %v303
    %v305 = vpop.xlane.xlu0 %304
    %v306 = vmax.f32 %v302, 1e-24
    %v307 = vmax.f32 %v305, 1e-24
    %v308 = vrsqrt.pop %v306
    %v309 = vrsqrt.pop %v307
    %v312 = vlaneseq
    %v313 = vand.u32 %v312, 127
    %v314 = vlaneseq
    %v315 = vshrl.u32 %v314, 7
    %v316 = vsub.s32 %v313, %v315
    %v317 = vrot.slane %v308, %v316
    %v318 = vlaneseq
    %v319 = vshrl.u32 %v318, 7
    %v320 = vsub.s32 %v313, %v319
    %v321 = vrot.slane %v309, %v320
    %v324 = vmul.f32 %v219, %v317
    %v325 = vmul.f32 %v295, %v321
    %v326 = vmul.f32 %v145, 14.285714
    %v327 = vmul.f32 %v324, 14.285714
    %v328 = vmul.f32 %v325, 14.285714
    %v331 = vrot.slane %v328, 7
    %v332 = vsel %vm104, %v331, %v327
    %vm334 = vcmask 58368
    %v335 = vsel %vm334, %v332, -inf
    %336 = vmax.xlane.f32.xlu0 %v335
    %v337 = vpop.xlane.xlu0 %336
    %v338 = vmax.f32 %v326, %v337
    %v339 = vsub.f32 %v326, %v338
    %v340 = vmul.f32 %v339, 1.442695
    %v341 = vpow.pop %v340
    %v343 = vrot.slane %v338, 1
    %v346 = vsub.f32 %v327, %v338
    %v347 = vsub.f32 %v328, %v343
    %v348 = vmul.f32 %v346, 1.442695
    %v349 = vpow.pop %v348
    %v350 = vmul.f32 %v347, 1.442695
    %v351 = vpow.pop %v350
    %v354 = vrot.slane %v351, 7
    %v355 = vsel %vm104, %v354, %v349
    %v357 = vsel %vm334, %v355, 0.0
    %358 = vadd.xlane.f32.xlu0 %v357
    %v359 = vpop.xlane.xlu0 %358
    %v360 = vadd.f32 %v341, %v359
    %v361 = vlog2.pop %v360
    %v362 = vmul.f32 %v361, 0.6931472
    %v363 = vadd.f32 %v338, %v362
    %v364 = vsub.f32 %v363, %v326
    %vm365 = vcmask 1024
    %v366 = vsel %vm365, %v364, 0.0
    %367 = vadd.xlane.f32.xlu0 %v366
    %v368 = vpop.xlane.xlu0 %367
    %v369 = vrot.slane %v368, 4
    %v370 = vadd.f32 %v368, %v369
    %v371 = vrot.slane %v370, 2
    %v372 = vadd.f32 %v370, %v371
    %v373 = vrot.slane %v372, 1
    %v374 = vadd.f32 %v372, %v373
    %s375 = vtos %v374
    %v376 = vrcp.pop 2.0
    %s377 = vtos %v376
    %s378 = smul.f32 %s375, %s377
    %v379 = vmul.f32 %v82, %v82
    %v380 = vmul.f32 %v83, %v83
    %v383 = vsel %vm104, %v380, %v379
    %v385 = vsel %vm107, %v383, 0.0
    %386 = vadd.xlane.f32.xlu0 %v385
    %v387 = vpop.xlane.xlu0 %386
    %v388 = vmax.f32 %v387, 1e-24
    %v389 = vrsqrt.pop %v388
    %v391 = vrot.slane %v389, 1
    %v394 = vmul.f32 %v82, %v389
    %v395 = vmul.f32 %v83, %v391
    %v396 = vmul.f32 %v98, %v98
    %v397 = vmul.f32 %v99, %v99
    %v400 = vsel %vm104, %v397, %v396
    %v402 = vsel %vm107, %v400, 0.0
    %403 = vadd.xlane.f32.xlu0 %v402
    %v404 = vpop.xlane.xlu0 %403
    %v405 = vmax.f32 %v404, 1e-24
    %v406 = vrsqrt.pop %v405
    %v408 = vrot.slane %v406, 1
    %v411 = vmul.f32 %v98, %v406
    %v412 = vmul.f32 %v99, %v408
    %v413 = vmul.f32 %v394, %v411
    %v414 = vmul.f32 %v395, %v412
    %v417 = vrot.slane %v414, 7
    %v418 = vsel %vm104, %v417, %v413
    %v420 = vsel %vm107, %v418, 0.0
    %421 = vadd.xlane.f32.xlu0 %v420
    %v422 = vpop.xlane.xlu0 %421
    %v424 = vsel %vm34, %v394, 0
    %v427 = vsel %vm34, %v26, 0
    %429 = vmatprep.subr.mxu0 0.0
    %430 = vmatpush1.xpose.msra.mxu0 %v427
    %431 = vmatprep.subr.mxu0 0.0
    %432 = vmatpush1.xpose.msra.mxu0 0.0
    %433 = vmatprep.subr.mxu0 0.0
    %434 = vmatpush1.xpose.msra.mxu0 0.0
    %435 = vmatprep.subr.mxu0 0.0
    %436 = vmatpush1.xpose.msra.mxu0 0.0
    %437 = vmatprep.subr.mxu0 0.0
    %438 = vmatpush1.xpose.msra.mxu0 0.0
    %439 = vmatprep.subr.mxu0 0.0
    %440 = vmatpush1.xpose.msra.mxu0 0.0
    %441 = vmatprep.subr.mxu0 0.0
    %442 = vmatpush1.xpose.msra.mxu0 0.0
    %443 = vmatprep.subr.mxu0 0.0
    %444 = vmatpush1.xpose.msra.mxu0 0.0
    %445 = vmatprep.subr.mxu0 0.0
    %446 = vmatpush1.xpose.msra.mxu0 0.0
    %447 = vmatprep.subr.mxu0 0.0
    %448 = vmatpush1.xpose.msra.mxu0 0.0
    %449 = vmatprep.subr.mxu0 0.0
    %450 = vmatpush1.xpose.msra.mxu0 0.0
    %451 = vmatprep.subr.mxu0 0.0
    %452 = vmatpush1.xpose.msra.mxu0 0.0
    %453 = vmatprep.subr.mxu0 0.0
    %454 = vmatpush1.xpose.msra.mxu0 0.0
    %455 = vmatprep.subr.mxu0 0.0
    %456 = vmatpush1.xpose.msra.mxu0 0.0
    %457 = vmatprep.subr.mxu0 0.0
    %458 = vmatpush1.xpose.msra.mxu0 0.0
    %459 = vmatprep.subr.mxu0 0.0
    %460 = vmatpush1.xpose.msra.mxu0 0.0
    %461 = vmatprep.subr.mxu0 0.0
    %462 = vmatpush1.xpose.msra.mxu0 0.0
    %463 = vmatprep.subr.mxu0 0.0
    %464 = vmatpush1.xpose.msra.mxu0 0.0
    %465 = vmatprep.subr.mxu0 0.0
    %466 = vmatpush1.xpose.msra.mxu0 0.0
    %467 = vmatprep.subr.mxu0 0.0
    %468 = vmatpush1.xpose.msra.mxu0 0.0
    %469 = vmatprep.subr.mxu0 0.0
    %470 = vmatpush1.xpose.msra.mxu0 0.0
    %471 = vmatprep.subr.mxu0 0.0
    %472 = vmatpush1.xpose.msra.mxu0 0.0
    %473 = vmatprep.subr.mxu0 0.0
    %474 = vmatpush1.xpose.msra.mxu0 0.0
    %475 = vmatprep.subr.mxu0 0.0
    %476 = vmatpush1.xpose.msra.mxu0 0.0
    %477 = vmatprep.subr.mxu0 0.0
    %478 = vmatpush1.xpose.msra.mxu0 0.0
    %479 = vmatprep.subr.mxu0 0.0
    %480 = vmatpush1.xpose.msra.mxu0 0.0
    %481 = vmatprep.subr.mxu0 0.0
    %482 = vmatpush1.xpose.msra.mxu0 0.0
    %483 = vmatprep.subr.mxu0 0.0
    %484 = vmatpush1.xpose.msra.mxu0 0.0
    %485 = vmatprep.subr.mxu0 0.0
    %486 = vmatpush1.xpose.msra.mxu0 0.0
    %487 = vmatprep.subr.mxu0 0.0
    %488 = vmatpush1.xpose.msra.mxu0 0.0
    %489 = vmatprep.subr.mxu0 0.0
    %490 = vmatpush1.xpose.msra.mxu0 0.0
    %491 = vmatprep.subr.mxu0 0.0
    %492 = vmatpush1.xpose.msra.mxu0 0.0
    %493 = vmatprep.mubr.f32.mxu0 0.0
    %494 = vmatmul.mubr.f32.gmra.mrb[0].mxu0 %v424
    %v495 = vpop.f32.mrb[0].mxu0
    %v496 = vadd.f32 0.0, %v495
    %v497 = vpop.f32.mrb[0].mxu0
    %498 = vdwg.mxu0
    %v500 = vsel %vm34, %v395, 0
    %v503 = vsel %vm34, %v27, 0
    %505 = vmatprep.subr.mxu0 0.0
    %506 = vmatpush1.xpose.msra.mxu0 %v503
    %507 = vmatprep.subr.mxu0 0.0
    %508 = vmatpush1.xpose.msra.mxu0 0.0
    %509 = vmatprep.subr.mxu0 0.0
    %510 = vmatpush1.xpose.msra.mxu0 0.0
    %511 = vmatprep.subr.mxu0 0.0
    %512 = vmatpush1.xpose.msra.mxu0 0.0
    %513 = vmatprep.subr.mxu0 0.0
    %514 = vmatpush1.xpose.msra.mxu0 0.0
    %515 = vmatprep.subr.mxu0 0.0
    %516 = vmatpush1.xpose.msra.mxu0 0.0
    %517 = vmatprep.subr.mxu0 0.0
    %518 = vmatpush1.xpose.msra.mxu0 0.0
    %519 = vmatprep.subr.mxu0 0.0
    %520 = vmatpush1.xpose.msra.mxu0 0.0
    %521 = vmatprep.subr.mxu0 0.0
    %522 = vmatpush1.xpose.msra.mxu0 0.0
    %523 = vmatprep.subr.mxu0 0.0
    %524 = vmatpush1.xpose.msra.mxu0 0.0
    %525 = vmatprep.subr.mxu0 0.0
    %526 = vmatpush1.xpose.msra.mxu0 0.0
    %527 = vmatprep.subr.mxu0 0.0
    %528 = vmatpush1.xpose.msra.mxu0 0.0
    %529 = vmatprep.subr.mxu0 0.0
    %530 = vmatpush1.xpose.msra.mxu0 0.0
    %531 = vmatprep.subr.mxu0 0.0
    %532 = vmatpush1.xpose.msra.mxu0 0.0
    %533 = vmatprep.subr.mxu0 0.0
    %534 = vmatpush1.xpose.msra.mxu0 0.0
    %535 = vmatprep.subr.mxu0 0.0
    %536 = vmatpush1.xpose.msra.mxu0 0.0
    %537 = vmatprep.subr.mxu0 0.0
    %538 = vmatpush1.xpose.msra.mxu0 0.0
    %539 = vmatprep.subr.mxu0 0.0
    %540 = vmatpush1.xpose.msra.mxu0 0.0
    %541 = vmatprep.subr.mxu0 0.0
    %542 = vmatpush1.xpose.msra.mxu0 0.0
    %543 = vmatprep.subr.mxu0 0.0
    %544 = vmatpush1.xpose.msra.mxu0 0.0
    %545 = vmatprep.subr.mxu0 0.0
    %546 = vmatpush1.xpose.msra.mxu0 0.0
    %547 = vmatprep.subr.mxu0 0.0
    %548 = vmatpush1.xpose.msra.mxu0 0.0
    %549 = vmatprep.subr.mxu0 0.0
    %550 = vmatpush1.xpose.msra.mxu0 0.0
    %551 = vmatprep.subr.mxu0 0.0
    %552 = vmatpush1.xpose.msra.mxu0 0.0
    %553 = vmatprep.subr.mxu0 0.0
    %554 = vmatpush1.xpose.msra.mxu0 0.0
    %555 = vmatprep.subr.mxu0 0.0
    %556 = vmatpush1.xpose.msra.mxu0 0.0
    %557 = vmatprep.subr.mxu0 0.0
    %558 = vmatpush1.xpose.msra.mxu0 0.0
    %559 = vmatprep.subr.mxu0 0.0
    %560 = vmatpush1.xpose.msra.mxu0 0.0
    %561 = vmatprep.subr.mxu0 0.0
    %562 = vmatpush1.xpose.msra.mxu0 0.0
    %563 = vmatprep.subr.mxu0 0.0
    %564 = vmatpush1.xpose.msra.mxu0 0.0
    %565 = vmatprep.subr.mxu0 0.0
    %566 = vmatpush1.xpose.msra.mxu0 0.0
    %567 = vmatprep.subr.mxu0 0.0
    %568 = vmatpush1.xpose.msra.mxu0 0.0
    %569 = vmatprep.mubr.f32.mxu0 0.0
    %570 = vmatmul.mubr.f32.gmra.mrb[0].mxu0 %v500
    %v571 = vpop.f32.mrb[0].mxu0
    %v572 = vadd.f32 0.0, %v571
    %v573 = vpop.f32.mrb[0].mxu0
    %574 = vdwg.mxu0
    %v575 = vmul.f32 %v26, %v26
    %v576 = vmul.f32 %v27, %v27
    %v577 = vsel %vm34, %v575, 0.0
    %578 = vadd.xlane.f32.xlu0 %v577
    %v579 = vpop.xlane.xlu0 %578
    %v580 = vsel %vm34, %v576, 0.0
    %581 = vadd.xlane.f32.xlu0 %v580
    %v582 = vpop.xlane.xlu0 %581
    %v583 = vmax.f32 %v579, 1e-24
    %v584 = vmax.f32 %v582, 1e-24
    %v585 = vrsqrt.pop %v583
    %v586 = vrsqrt.pop %v584
    %v589 = vlaneseq
    %v590 = vshrl.u32 %v589, 7
    %v591 = vsub.s32 %v313, %v590
    %v592 = vrot.slane %v585, %v591
    %v593 = vlaneseq
    %v594 = vshrl.u32 %v593, 7
    %v595 = vsub.s32 %v313, %v594
    %v596 = vrot.slane %v586, %v595
    %v599 = vmul.f32 %v496, %v592
    %v600 = vmul.f32 %v572, %v596
    %v601 = vmul.f32 %v422, 14.285714
    %v602 = vmul.f32 %v599, 14.285714
    %v603 = vmul.f32 %v600, 14.285714
    %v606 = vrot.slane %v603, 7
    %v607 = vsel %vm104, %v606, %v602
    %v609 = vsel %vm334, %v607, -inf
    %610 = vmax.xlane.f32.xlu0 %v609
    %v611 = vpop.xlane.xlu0 %610
    %v612 = vmax.f32 %v601, %v611
    %v613 = vsub.f32 %v601, %v612
    %v614 = vmul.f32 %v613, 1.442695
    %v615 = vpow.pop %v614
    %v617 = vrot.slane %v612, 1
    %v620 = vsub.f32 %v602, %v612
    %v621 = vsub.f32 %v603, %v617
    %v622 = vmul.f32 %v620, 1.442695
    %v623 = vpow.pop %v622
    %v624 = vmul.f32 %v621, 1.442695
    %v625 = vpow.pop %v624
    %v628 = vrot.slane %v625, 7
    %v629 = vsel %vm104, %v628, %v623
    %v631 = vsel %vm334, %v629, 0.0
    %632 = vadd.xlane.f32.xlu0 %v631
    %v633 = vpop.xlane.xlu0 %632
    %v634 = vadd.f32 %v615, %v633
    %v635 = vlog2.pop %v634
    %v636 = vmul.f32 %v635, 0.6931472
    %v637 = vadd.f32 %v612, %v636
    %v638 = vsub.f32 %v637, %v601
    %v639 = vsel %vm365, %v638, 0.0
    %640 = vadd.xlane.f32.xlu0 %v639
    %v641 = vpop.xlane.xlu0 %640
    %v642 = vrot.slane %v641, 4
    %v643 = vadd.f32 %v641, %v642
    %v644 = vrot.slane %v643, 2
    %v645 = vadd.f32 %v643, %v644
    %v646 = vrot.slane %v645, 1
    %v647 = vadd.f32 %v645, %v646
    %s648 = vtos %v647
    %v649 = vrcp.pop 2.0
    %s650 = vtos %v649
    %s651 = smul.f32 %s648, %s650
    %s652 = sadd.f32 %s378, %s651
    %s653 = scalar_lea.smem [#allocation5], 0
    %654 = sst [smem:[%s653]] %s652
    // Predicated region
    $region10: #{tpu_custom_call.1} parent=1 // pred_check
      _
    $region11: #{tpu_custom_call.1} parent=1 // pred_check_branch
      %656 = sbr.rel (0) target = $region13
    $region12: #{tpu_custom_call.1} parent=1 // pred_region
      %s658 = ssub.s32 16, 16
      %659 = vsyncadd [#allocation4], %s658
      %662 = dma.smem_to_hbm [#allocation5], 16, %s1, [#allocation4]
    $region13: #{tpu_custom_call.1} parent=1 // pred_fallthru
      _
    // Predicated region
    $region14: #{tpu_custom_call.1} parent=1 // pred_check
      _
    $region15: #{tpu_custom_call.1} parent=1 // pred_check_branch
      %664 = sbr.rel (0) target = $region17
    $region16: #{tpu_custom_call.1} parent=1 // pred_region
      %665 = dma.done [#allocation4], 16
    $region17: #{tpu_custom_call.1} parent=1 // pred_fallthru
      _
    %666 = sfence
    %667 = vsyncpa [#allocation3], 1
    %668 = vsyncpa [#allocation4], 1

</llo_original>
